<compile_context>
chip_gen: v7x
topology: tpu7x:2x2x1
jax: 0.10.0
libtpu: 0.0.40
codegen_flags: <defaults>
</compile_context>

<pallas_src>
import functools
import numpy as np

import jax
import jax.numpy as jnp
from jax.experimental import pallas as pl
from jax.experimental.pallas import tpu as pltpu


def _round_up(x, m):
    return (x + m - 1) // m * m


def _vmem_limit_bytes():
    """Scoped-VMEM limit safe on every TPU generation (v7x has 64 MiB per TC)."""
    try:
        cap = int(pltpu.get_tpu_info().vmem_capacity_bytes)
    except Exception:  # pragma: no cover - conservative fallback
        cap = 64 << 20
    return min(cap, 64 << 20) - (4 << 20)   # headroom for Mosaic internal scratch


def _derive_tb(batch, fxp, hp, out_w, wbytes, block_b, tb_budget, weight_bytes):
    """Largest batch tile that fits the VMEM budget; keep >=2 grid steps when possible."""
    per_row = (2 * fxp * wbytes            # x/noise slab stream (double-buffered)
               + 2 * out_w * 4             # packed output stream (double-buffered)
               + 2 * hp * (4 + wbytes)     # h1/h2 f32 intermediates + matmul-dtype casts
               + 8 * 128 * 4)              # head / mu / pi / log_std / log_pi temporaries
    avail = max(tb_budget - weight_bytes, per_row * 8)
    tb = (avail // per_row) // 8 * 8
    tb = int(max(8, min(tb, block_b, _round_up(batch, 8))))
    # >=2 grid steps whenever the batch allows -> both TensorCores busy on v7x.
    b8 = _round_up(batch, 8)
    if b8 > 8:
        tb = min(tb, _round_up(b8 // 2, 8))
    return int(tb)


def _actor_kernel(x_ref, w1_ref, b1_ref, w2_ref, b2_ref, w3_ref, b3_ref, out_ref, *,
                  log_std_min, log_std_max, feat_dim, action_dim, out_width):
    wdt = w1_ref.dtype          # matmul operand dtype (bf16 path, f32 fallback)
    F, A = feat_dim, action_dim

    # ---- encoder (identity) + noise unpack (packed in zero-weight lanes F..F+A-1) ----
    x = x_ref[...]                                      # (TB, FXp), already matmul dtype
    noise = x[:, F:F + A].astype(jnp.float32)

    # ---- MLP trunk: Linear -> ReLU -> Linear -> ReLU (f32 accumulate / f32 VPU) ----
    h1 = jnp.dot(x, w1_ref[...], preferred_element_type=jnp.float32) + b1_ref[...]
    h1 = jnp.maximum(h1, 0.0).astype(wdt)
    h2 = jnp.dot(h1, w2_ref[...], preferred_element_type=jnp.float32) + b2_ref[...]
    h2 = jnp.maximum(h2, 0.0).astype(wdt)

    # ---- fused final linear head: mu in lanes [0,A), log_std in lanes [A,2A) ----
    head = jnp.dot(h2, w3_ref[...], preferred_element_type=jnp.float32) + b3_ref[...]
    mu = head[:, :A]                    # slice BEFORE any reduction (padded lanes unused)
    log_std = head[:, A:2 * A]

    # ---- log_std squashing / rescaling ----
    log_std = jnp.tanh(log_std)
    log_std = log_std_min + 0.5 * (log_std_max - log_std_min) * (log_std + 1.0)

    # ---- reparameterized sample (compute_pi=True) ----
    std = jnp.exp(log_std)
    pi = mu + noise * std

    # ---- gaussian_logprob (compute_log_pi=True) ----
    residual = jnp.sum(-0.5 * noise * noise - log_std, axis=-1, keepdims=True)
    log_pi = residual - 0.5 * float(np.log(2.0 * np.pi)) * A            # (TB, 1)

    # ---- squash ----
    mu_t = jnp.tanh(mu)
    pi_t = jnp.tanh(pi)
    correction = jnp.log(jnp.maximum(1.0 - pi_t * pi_t, 0.0) + 1e-6)
    log_pi = log_pi - jnp.sum(correction, axis=-1, keepdims=True)

    # ---- pack outputs into one lane-dense slab: single unmasked 128-lane store ----
    tb = out_ref.shape[0]
    pieces = [mu_t, pi_t, log_std, log_pi]
    pad_w = out_width - (3 * A + 1)
    if pad_w > 0:
        pieces.append(jnp.zeros((tb, pad_w), jnp.float32))
    out_ref[...] = jnp.concatenate(pieces, axis=-1).astype(out_ref.dtype)


def prepare_params(params, *, use_bf16=True):
    """Pad / cast weights ONCE (hoisted out of the per-call path).

    Layout: F is padded to FXp = round_up(F + A, 128); the extra A lanes carry the
    Gaussian noise at call time (their w1 rows are exactly zero).  The third layer's
    mu|log_std heads are kept fused as a single (Hp, 128) lane-aligned weight.
    Note: prefer hidden_dim as a multiple of 256 on v6e/v7x (256x256 MXU); existing
    smaller H is NOT padded beyond 128 (that would add real FLOPs/bytes).
    """
    w1, b1, w2, b2, w3, b3 = params
    F, H = w1.shape
    A = w3.shape[1] // 2
    wdt = jnp.bfloat16 if use_bf16 else jnp.float32

    FXp = _round_up(F + A, 128)
    Hp = _round_up(H, 128)
    HEADW = _round_up(2 * A, 128)

    w1p = jnp.zeros((FXp, Hp), wdt).at[:F, :H].set(w1.astype(wdt))
    w2p = jnp.zeros((Hp, Hp), wdt).at[:H, :H].set(w2.astype(wdt))
    w3p = jnp.zeros((Hp, HEADW), wdt).at[:H, :2 * A].set(w3.astype(wdt))
    b1p = jnp.zeros((1, Hp), jnp.float32).at[:, :H].set(
        b1.reshape(1, -1).astype(jnp.float32))
    b2p = jnp.zeros((1, Hp), jnp.float32).at[:, :H].set(
        b2.reshape(1, -1).astype(jnp.float32))
    b3p = jnp.zeros((1, HEADW), jnp.float32).at[:, :2 * A].set(
        b3.reshape(1, -1).astype(jnp.float32))

    return dict(w1=w1p, b1=b1p, w2=w2p, b2=b2p, w3=w3p, b3=b3p,
                feat_dim=F, hidden_dim=H, action_dim=A)


def actor_forward(x, prepared, noise, *, log_std_min, log_std_max, block_b=1024):
    """Fused Actor forward. Returns (mu, pi, log_pi, log_std)."""
    B, Fin = x.shape
    F = prepared["feat_dim"]
    A = prepared["action_dim"]
    assert Fin == F and noise.shape == (B, A)

    w1p, b1p, w2p, b2p, w3p, b3p = (prepared[k] for k in ("w1", "b1", "w2", "b2", "w3", "b3"))
    FXp, Hp = w1p.shape
    HEADW = w3p.shape[1]
    OUT_W = _round_up(3 * A + 1, 128)   # packed slab: [mu | pi | log_std | log_pi | 0s]
    wdt = w1p.dtype
    wbytes = jnp.dtype(wdt).itemsize

    weight_bytes = ((w1p.size + w2p.size + w3p.size) * wbytes
                    + (b1p.size + b2p.size + b3p.size) * 4)
    vmem_limit = _vmem_limit_bytes()
    TB = _derive_tb(B, FXp, Hp, OUT_W, wbytes, block_b,
                    (vmem_limit * 4) // 5, weight_bytes)
    Bp = _round_up(B, TB)

    # One lane-dense input slab per row: [x | noise | zero pad].  The noise lanes hit
    # zero rows of w1p, so the trunk is unaffected; the kernel slices them back out.
    xp = jnp.zeros((Bp, FXp), wdt)
    xp = xp.at[:B, :F].set(x.astype(wdt))
    xp = xp.at[:B, F:F + A].set(noise.astype(wdt))

    kernel = functools.partial(
        _actor_kernel,
        log_std_min=float(log_std_min), log_std_max=float(log_std_max),
        feat_dim=F, action_dim=A, out_width=OUT_W)

    def run(single_buffer_weights):
        if single_buffer_weights:
            # Grid-invariant operands: one VMEM copy is enough (halves weight VMEM).
            res = lambda shape: pl.BlockSpec(shape, lambda i: (0, 0),
                                             pipeline_mode=pl.Buffered(1))
        else:
            res = lambda shape: pl.BlockSpec(shape, lambda i: (0, 0))
        return pl.pallas_call(
            kernel,
            out_shape=jax.ShapeDtypeStruct((Bp, OUT_W), jnp.float32),
            grid=(Bp // TB,),
            in_specs=[
                pl.BlockSpec((TB, FXp), lambda i: (i, 0)),   # x+noise slab (streamed)
                res((FXp, Hp)),                              # w1 (resident)
                res((1, Hp)),                                # b1
                res((Hp, Hp)),                               # w2
                res((1, Hp)),                                # b2
                res((Hp, HEADW)),                            # fused mu|log_std head W
                res((1, HEADW)),                             # fused head bias
            ],
            out_specs=pl.BlockSpec((TB, OUT_W), lambda i: (i, 0)),
            compiler_params=pltpu.CompilerParams(
                dimension_semantics=("parallel",),
                vmem_limit_bytes=int(vmem_limit)),
        )(xp, w1p, b1p, w2p, b2p, w3p, b3p)

    try:
        out = run(True)
    except Exception:
        # TODO(synk): fallback for jax builds that reject pl.Buffered(1) single-buffering.
        out = run(False)

    mu = out[:B, 0:A]
    pi = out[:B, A:2 * A]
    log_std = out[:B, 2 * A:3 * A]
    log_pi = out[:B, 3 * A:3 * A + 1]
    return mu, pi, log_pi, log_std


def make_params(key, in_dim, hidden_dim, action_dim):
    """Deterministic synthetic init (stand-in for weight_init: orthogonal W, zero b)."""
    k1, k2, k3 = jax.random.split(key, 3)
    def lin(k, fan_in, fan_out):
        w = jax.random.normal(k, (fan_in, fan_out), jnp.float32) / jnp.sqrt(fan_in)
        b = jnp.zeros((1, fan_out), jnp.float32)
        return w, b
    w1, b1 = lin(k1, in_dim, hidden_dim)
    w2, b2 = lin(k2, hidden_dim, hidden_dim)
    w3, b3 = lin(k3, hidden_dim, 2 * action_dim)
    return (w1, b1, w2, b2, w3, b3)


def actor_reference(x, params, noise, *, action_dim, log_std_min, log_std_max,
                    use_bf16=True):
    """Pure-JAX reference (same bf16-operand / f32-accumulate matmul convention)."""
    w1, b1, w2, b2, w3, b3 = params
    wdt = jnp.bfloat16 if use_bf16 else jnp.float32
    def mm(a, w):
        return jnp.dot(a.astype(wdt), w.astype(wdt),
                       preferred_element_type=jnp.float32)
    h = jnp.maximum(mm(x, w1) + b1, 0.0)
    h = jnp.maximum(mm(h, w2) + b2, 0.0)
    out = mm(h, w3) + b3
    mu, log_std = out[:, :action_dim], out[:, action_dim:]
    log_std = jnp.tanh(log_std)
    log_std = log_std_min + 0.5 * (log_std_max - log_std_min) * (log_std + 1.0)
    std = jnp.exp(log_std)
    pi = mu + noise * std
    residual = jnp.sum(-0.5 * noise ** 2 - log_std, axis=-1, keepdims=True)
    log_pi = residual - 0.5 * np.log(2 * np.pi) * action_dim
    mu_t, pi_t = jnp.tanh(mu), jnp.tanh(pi)
    log_pi = log_pi - jnp.sum(jnp.log(jnp.maximum(1 - pi_t ** 2, 0.0) + 1e-6),
                              axis=-1, keepdims=True)
    return mu_t, pi_t, log_pi, log_std


if __name__ == "__main__":
    B, F, H, A = 8, 32, 32, 4          # batch, encoder.out_dim, hidden_dim, action_dim
    LOG_STD_MIN, LOG_STD_MAX = -10.0, 2.0

    key = jax.random.PRNGKey(0)
    kx, kp, kn = jax.random.split(key, 3)
    x = jax.random.normal(kx, (B, F), jnp.float32)          # encoder(x) == x (identity)
    params = make_params(kp, F, H, A)
    # torch.randn_like(mu) equivalent; pre-quantized to bf16 because the kernel carries
    # the noise inside the bf16 matmul-input slab.
    noise = jax.random.normal(kn, (B, A), jnp.float32)
    noise = noise.astype(jnp.bfloat16).astype(jnp.float32)

    prepared = prepare_params(params)    # pad/cast weights ONCE (hoisted out of fwd)

    mu, pi, log_pi, log_std = actor_forward(
        x, prepared, noise, log_std_min=LOG_STD_MIN, log_std_max=LOG_STD_MAX)
    jax.block_until_ready((mu, pi, log_pi, log_std))

    mu_r, pi_r, lp_r, ls_r = actor_reference(
        x, params, noise, action_dim=A,
        log_std_min=LOG_STD_MIN, log_std_max=LOG_STD_MAX)
    np.testing.assert_allclose(np.asarray(mu), np.asarray(mu_r), rtol=5e-3, atol=5e-3)
    np.testing.assert_allclose(np.asarray(pi), np.asarray(pi_r), rtol=5e-3, atol=5e-3)
    np.testing.assert_allclose(np.asarray(log_pi), np.asarray(lp_r), rtol=1e-2, atol=1e-2)
    np.testing.assert_allclose(np.asarray(log_std), np.asarray(ls_r), rtol=5e-3, atol=5e-3)

    print("KERNEL_OK")
</pallas_src>

<mosaic_0001>
module attributes {stable_mosaic.version = 11 : i64} {
  func.func @_actor_kernel(%arg0: i32, %arg1: memref<8x128xbf16, #tpu.memory_space<vmem>>, %arg2: memref<128x128xbf16, #tpu.memory_space<vmem>>, %arg3: memref<1x128xf32, #tpu.memory_space<vmem>>, %arg4: memref<128x128xbf16, #tpu.memory_space<vmem>>, %arg5: memref<1x128xf32, #tpu.memory_space<vmem>>, %arg6: memref<128x128xbf16, #tpu.memory_space<vmem>>, %arg7: memref<1x128xf32, #tpu.memory_space<vmem>>, %arg8: memref<8x128xf32, #tpu.memory_space<vmem>>) attributes {dimension_semantics = [#tpu.dimension_semantics<parallel>], iteration_bounds = array<i64: 1>, scalar_prefetch = 0 : i64, scratch_operands = 0 : i64, tpu.core_type = #tpu.core_type<tc>, window_params = [{transform_indices = @transform_0, window_bounds = array<i64: 8, 128>}, {pipeline_mode = #tpu.pipeline_mode<synchronous>, transform_indices = @transform_1, window_bounds = array<i64: 128, 128>}, {pipeline_mode = #tpu.pipeline_mode<synchronous>, transform_indices = @transform_2, window_bounds = array<i64: 1, 128>}, {pipeline_mode = #tpu.pipeline_mode<synchronous>, transform_indices = @transform_3, window_bounds = array<i64: 128, 128>}, {pipeline_mode = #tpu.pipeline_mode<synchronous>, transform_indices = @transform_4, window_bounds = array<i64: 1, 128>}, {pipeline_mode = #tpu.pipeline_mode<synchronous>, transform_indices = @transform_5, window_bounds = array<i64: 128, 128>}, {pipeline_mode = #tpu.pipeline_mode<synchronous>, transform_indices = @transform_6, window_bounds = array<i64: 1, 128>}, {transform_indices = @transform_7, window_bounds = array<i64: 8, 128>}]} {
    %c0 = arith.constant 0 : index
    %c0_0 = arith.constant 0 : index
    %0 = vector.load %arg1[%c0, %c0_0] : memref<8x128xbf16, #tpu.memory_space<vmem>>, vector<8x128xbf16>
    %1 = vector.extract_strided_slice %0 {offsets = [0, 32], sizes = [8, 4], strides = [1, 1]} : vector<8x128xbf16> to vector<8x4xbf16>
    %2 = arith.extf %1 : vector<8x4xbf16> to vector<8x4xf32>
    %c0_1 = arith.constant 0 : index
    %c0_2 = arith.constant 0 : index
    %3 = vector.load %arg2[%c0_1, %c0_2] : memref<128x128xbf16, #tpu.memory_space<vmem>>, vector<128x128xbf16>
    %cst = arith.constant dense<0.000000e+00> : vector<8x128xf32>
    %4 = tpu.matmul %0, %3, %cst {dimension_numbers = #tpu.dot_dimension_numbers<[1], [0], [0], [1], [0, 0, 1, 1], [], []>} : vector<8x128xbf16>, vector<128x128xbf16>, vector<8x128xf32> -> vector<8x128xf32>
    %c0_3 = arith.constant 0 : index
    %c0_4 = arith.constant 0 : index
    %5 = vector.load %arg3[%c0_3, %c0_4] : memref<1x128xf32, #tpu.memory_space<vmem>>, vector<1x128xf32>
    %6 = vector.broadcast %5 : vector<1x128xf32> to vector<8x128xf32>
    %7 = arith.addf %4, %6 : vector<8x128xf32>
    %cst_5 = arith.constant 0.000000e+00 : f32
    %8 = vector.broadcast %cst_5 : f32 to vector<8x128xf32>
    %9 = arith.maximumf %7, %8 : vector<8x128xf32>
    %10 = arith.truncf %9 : vector<8x128xf32> to vector<8x128xbf16>
    %c0_6 = arith.constant 0 : index
    %c0_7 = arith.constant 0 : index
    %11 = vector.load %arg4[%c0_6, %c0_7] : memref<128x128xbf16, #tpu.memory_space<vmem>>, vector<128x128xbf16>
    %cst_8 = arith.constant dense<0.000000e+00> : vector<8x128xf32>
    %12 = tpu.matmul %10, %11, %cst_8 {dimension_numbers = #tpu.dot_dimension_numbers<[1], [0], [0], [1], [0, 0, 1, 1], [], []>} : vector<8x128xbf16>, vector<128x128xbf16>, vector<8x128xf32> -> vector<8x128xf32>
    %c0_9 = arith.constant 0 : index
    %c0_10 = arith.constant 0 : index
    %13 = vector.load %arg5[%c0_9, %c0_10] : memref<1x128xf32, #tpu.memory_space<vmem>>, vector<1x128xf32>
    %14 = vector.broadcast %13 : vector<1x128xf32> to vector<8x128xf32>
    %15 = arith.addf %12, %14 : vector<8x128xf32>
    %cst_11 = arith.constant 0.000000e+00 : f32
    %16 = vector.broadcast %cst_11 : f32 to vector<8x128xf32>
    %17 = arith.maximumf %15, %16 : vector<8x128xf32>
    %18 = arith.truncf %17 : vector<8x128xf32> to vector<8x128xbf16>
    %c0_12 = arith.constant 0 : index
    %c0_13 = arith.constant 0 : index
    %19 = vector.load %arg6[%c0_12, %c0_13] : memref<128x128xbf16, #tpu.memory_space<vmem>>, vector<128x128xbf16>
    %cst_14 = arith.constant dense<0.000000e+00> : vector<8x128xf32>
    %20 = tpu.matmul %18, %19, %cst_14 {dimension_numbers = #tpu.dot_dimension_numbers<[1], [0], [0], [1], [0, 0, 1, 1], [], []>} : vector<8x128xbf16>, vector<128x128xbf16>, vector<8x128xf32> -> vector<8x128xf32>
    %c0_15 = arith.constant 0 : index
    %c0_16 = arith.constant 0 : index
    %21 = vector.load %arg7[%c0_15, %c0_16] : memref<1x128xf32, #tpu.memory_space<vmem>>, vector<1x128xf32>
    %22 = vector.broadcast %21 : vector<1x128xf32> to vector<8x128xf32>
    %23 = arith.addf %20, %22 : vector<8x128xf32>
    %24 = vector.extract_strided_slice %23 {offsets = [0, 0], sizes = [8, 4], strides = [1, 1]} : vector<8x128xf32> to vector<8x4xf32>
    %25 = vector.extract_strided_slice %23 {offsets = [0, 4], sizes = [8, 4], strides = [1, 1]} : vector<8x128xf32> to vector<8x4xf32>
    %26 = math.tanh %25 : vector<8x4xf32>
    %cst_17 = arith.constant 1.000000e+00 : f32
    %27 = vector.broadcast %cst_17 : f32 to vector<8x4xf32>
    %28 = arith.addf %26, %27 : vector<8x4xf32>
    %cst_18 = arith.constant 6.000000e+00 : f32
    %29 = vector.broadcast %cst_18 : f32 to vector<8x4xf32>
    %30 = arith.mulf %29, %28 : vector<8x4xf32>
    %cst_19 = arith.constant -1.000000e+01 : f32
    %31 = vector.broadcast %cst_19 : f32 to vector<8x4xf32>
    %32 = arith.addf %31, %30 : vector<8x4xf32>
    %33 = math.exp %32 : vector<8x4xf32>
    %34 = arith.mulf %2, %33 : vector<8x4xf32>
    %35 = arith.addf %24, %34 : vector<8x4xf32>
    %cst_20 = arith.constant -5.000000e-01 : f32
    %36 = vector.broadcast %cst_20 : f32 to vector<8x4xf32>
    %37 = arith.mulf %36, %2 : vector<8x4xf32>
    %38 = arith.mulf %37, %2 : vector<8x4xf32>
    %39 = arith.subf %38, %32 : vector<8x4xf32>
    %cst_21 = arith.constant dense<0.000000e+00> : vector<8xf32>
    %40 = vector.multi_reduction <add>, %39, %cst_21 [1] : vector<8x4xf32> to vector<8xf32>
    %41 = vector.shape_cast %40 : vector<8xf32> to vector<8x1xf32>
    %cst_22 = arith.constant 3.67575407 : f32
    %42 = vector.broadcast %cst_22 : f32 to vector<8x1xf32>
    %43 = arith.subf %41, %42 : vector<8x1xf32>
    %44 = math.tanh %24 : vector<8x4xf32>
    %45 = math.tanh %35 : vector<8x4xf32>
    %46 = arith.mulf %45, %45 : vector<8x4xf32>
    %cst_23 = arith.constant 1.000000e+00 : f32
    %47 = vector.broadcast %cst_23 : f32 to vector<8x4xf32>
    %48 = arith.subf %47, %46 : vector<8x4xf32>
    %cst_24 = arith.constant 0.000000e+00 : f32
    %49 = vector.broadcast %cst_24 : f32 to vector<8x4xf32>
    %50 = arith.maximumf %48, %49 : vector<8x4xf32>
    %cst_25 = arith.constant 9.99999997E-7 : f32
    %51 = vector.broadcast %cst_25 : f32 to vector<8x4xf32>
    %52 = arith.addf %50, %51 : vector<8x4xf32>
    %53 = math.log %52 : vector<8x4xf32>
    %cst_26 = arith.constant dense<0.000000e+00> : vector<8xf32>
    %54 = vector.multi_reduction <add>, %53, %cst_26 [1] : vector<8x4xf32> to vector<8xf32>
    %55 = vector.shape_cast %54 : vector<8xf32> to vector<8x1xf32>
    %56 = arith.subf %43, %55 : vector<8x1xf32>
    %cst_27 = arith.constant 0.000000e+00 : f32
    %57 = vector.broadcast %cst_27 : f32 to vector<8x115xf32>
    %58 = tpu.concatenate %44, %45, %32, %56, %57 in 1 : vector<8x4xf32>, vector<8x4xf32>, vector<8x4xf32>, vector<8x1xf32>, vector<8x115xf32> -> vector<8x128xf32>
    %c0_28 = arith.constant 0 : index
    %c0_29 = arith.constant 0 : index
    %59 = vector.load %arg8[%c0_28, %c0_29] : memref<8x128xf32, #tpu.memory_space<vmem>>, vector<8x128xf32>
    tpu.vector_store %arg8[%c0_28, %c0_29], %58 {strides = array<i32>} : memref<8x128xf32, #tpu.memory_space<vmem>>, vector<8x128xf32>,
    return
  }
  func.func @transform_0(%arg0: i32) -> (i32, i32) {
    %c0_i32 = arith.constant 0 : i32
    %c0_i32_0 = arith.constant 0 : i32
    return %arg0, %c0_i32 : i32, i32
  }
  func.func @transform_1(%arg0: i32) -> (i32, i32) {
    %c0_i32 = arith.constant 0 : i32
    %c0_i32_0 = arith.constant 0 : i32
    %c0_i32_1 = arith.constant 0 : i32
    return %c0_i32, %c0_i32_0 : i32, i32
  }
  func.func @transform_2(%arg0: i32) -> (i32, i32) {
    %c0_i32 = arith.constant 0 : i32
    %c0_i32_0 = arith.constant 0 : i32
    %c0_i32_1 = arith.constant 0 : i32
    return %c0_i32, %c0_i32_0 : i32, i32
  }
  func.func @transform_3(%arg0: i32) -> (i32, i32) {
    %c0_i32 = arith.constant 0 : i32
    %c0_i32_0 = arith.constant 0 : i32
    %c0_i32_1 = arith.constant 0 : i32
    return %c0_i32, %c0_i32_0 : i32, i32
  }
  func.func @transform_4(%arg0: i32) -> (i32, i32) {
    %c0_i32 = arith.constant 0 : i32
    %c0_i32_0 = arith.constant 0 : i32
    %c0_i32_1 = arith.constant 0 : i32
    return %c0_i32, %c0_i32_0 : i32, i32
  }
  func.func @transform_5(%arg0: i32) -> (i32, i32) {
    %c0_i32 = arith.constant 0 : i32
    %c0_i32_0 = arith.constant 0 : i32
    %c0_i32_1 = arith.constant 0 : i32
    return %c0_i32, %c0_i32_0 : i32, i32
  }
  func.func @transform_6(%arg0: i32) -> (i32, i32) {
    %c0_i32 = arith.constant 0 : i32
    %c0_i32_0 = arith.constant 0 : i32
    %c0_i32_1 = arith.constant 0 : i32
    return %c0_i32, %c0_i32_0 : i32, i32
  }
  func.func @transform_7(%arg0: i32) -> (i32, i32) {
    %c0_i32 = arith.constant 0 : i32
    %c0_i32_0 = arith.constant 0 : i32
    return %arg0, %c0_i32 : i32, i32
  }
}

module attributes {stable_mosaic.version = 11 : i64} {
  func.func @_actor_kernel(%arg0: i32, %arg1: memref<8x128xbf16, #tpu.memory_space<vmem>>, %arg2: memref<128x128xbf16, #tpu.memory_space<vmem>>, %arg3: memref<1x128xf32, #tpu.memory_space<vmem>>, %arg4: memref<128x128xbf16, #tpu.memory_space<vmem>>, %arg5: memref<1x128xf32, #tpu.memory_space<vmem>>, %arg6: memref<128x128xbf16, #tpu.memory_space<vmem>>, %arg7: memref<1x128xf32, #tpu.memory_space<vmem>>, %arg8: memref<8x128xf32, #tpu.memory_space<vmem>>) attributes {dimension_semantics = [#tpu.dimension_semantics<parallel>], iteration_bounds = array<i64: 1>, scalar_prefetch = 0 : i64, scratch_operands = 0 : i64, tpu.core_type = #tpu.core_type<tc>, window_params = [{transform_indices = @transform_0, window_bounds = array<i64: 8, 128>}, {pipeline_mode = #tpu.pipeline_mode<synchronous>, transform_indices = @transform_1, window_bounds = array<i64: 128, 128>}, {pipeline_mode = #tpu.pipeline_mode<synchronous>, transform_indices = @transform_2, window_bounds = array<i64: 1, 128>}, {pipeline_mode = #tpu.pipeline_mode<synchronous>, transform_indices = @transform_3, window_bounds = array<i64: 128, 128>}, {pipeline_mode = #tpu.pipeline_mode<synchronous>, transform_indices = @transform_4, window_bounds = array<i64: 1, 128>}, {pipeline_mode = #tpu.pipeline_mode<synchronous>, transform_indices = @transform_5, window_bounds = array<i64: 128, 128>}, {pipeline_mode = #tpu.pipeline_mode<synchronous>, transform_indices = @transform_6, window_bounds = array<i64: 1, 128>}, {transform_indices = @transform_7, window_bounds = array<i64: 8, 128>}]} {
    %c0 = arith.constant 0 : index
    %c0_0 = arith.constant 0 : index
    %0 = vector.load %arg1[%c0, %c0_0] : memref<8x128xbf16, #tpu.memory_space<vmem>>, vector<8x128xbf16>
    %1 = vector.extract_strided_slice %0 {offsets = [0, 32], sizes = [8, 4], strides = [1, 1]} : vector<8x128xbf16> to vector<8x4xbf16>
    %2 = arith.extf %1 : vector<8x4xbf16> to vector<8x4xf32>
    %c0_1 = arith.constant 0 : index
    %c0_2 = arith.constant 0 : index
    %3 = vector.load %arg2[%c0_1, %c0_2] : memref<128x128xbf16, #tpu.memory_space<vmem>>, vector<128x128xbf16>
    %cst = arith.constant dense<0.000000e+00> : vector<8x128xf32>
    %4 = tpu.matmul %0, %3, %cst {dimension_numbers = #tpu.dot_dimension_numbers<[1], [0], [0], [1], [0, 0, 1, 1], [], []>} : vector<8x128xbf16>, vector<128x128xbf16>, vector<8x128xf32> -> vector<8x128xf32>
    %c0_3 = arith.constant 0 : index
    %c0_4 = arith.constant 0 : index
    %5 = vector.load %arg3[%c0_3, %c0_4] : memref<1x128xf32, #tpu.memory_space<vmem>>, vector<1x128xf32>
    %6 = vector.broadcast %5 : vector<1x128xf32> to vector<8x128xf32>
    %7 = arith.addf %4, %6 : vector<8x128xf32>
    %cst_5 = arith.constant 0.000000e+00 : f32
    %8 = vector.broadcast %cst_5 : f32 to vector<8x128xf32>
    %9 = arith.maximumf %7, %8 : vector<8x128xf32>
    %10 = arith.truncf %9 : vector<8x128xf32> to vector<8x128xbf16>
    %c0_6 = arith.constant 0 : index
    %c0_7 = arith.constant 0 : index
    %11 = vector.load %arg4[%c0_6, %c0_7] : memref<128x128xbf16, #tpu.memory_space<vmem>>, vector<128x128xbf16>
    %cst_8 = arith.constant dense<0.000000e+00> : vector<8x128xf32>
    %12 = tpu.matmul %10, %11, %cst_8 {dimension_numbers = #tpu.dot_dimension_numbers<[1], [0], [0], [1], [0, 0, 1, 1], [], []>} : vector<8x128xbf16>, vector<128x128xbf16>, vector<8x128xf32> -> vector<8x128xf32>
    %c0_9 = arith.constant 0 : index
    %c0_10 = arith.constant 0 : index
    %13 = vector.load %arg5[%c0_9, %c0_10] : memref<1x128xf32, #tpu.memory_space<vmem>>, vector<1x128xf32>
    %14 = vector.broadcast %13 : vector<1x128xf32> to vector<8x128xf32>
    %15 = arith.addf %12, %14 : vector<8x128xf32>
    %cst_11 = arith.constant 0.000000e+00 : f32
    %16 = vector.broadcast %cst_11 : f32 to vector<8x128xf32>
    %17 = arith.maximumf %15, %16 : vector<8x128xf32>
    %18 = arith.truncf %17 : vector<8x128xf32> to vector<8x128xbf16>
    %c0_12 = arith.constant 0 : index
    %c0_13 = arith.constant 0 : index
    %19 = vector.load %arg6[%c0_12, %c0_13] : memref<128x128xbf16, #tpu.memory_space<vmem>>, vector<128x128xbf16>
    %cst_14 = arith.constant dense<0.000000e+00> : vector<8x128xf32>
    %20 = tpu.matmul %18, %19, %cst_14 {dimension_numbers = #tpu.dot_dimension_numbers<[1], [0], [0], [1], [0, 0, 1, 1], [], []>} : vector<8x128xbf16>, vector<128x128xbf16>, vector<8x128xf32> -> vector<8x128xf32>
    %c0_15 = arith.constant 0 : index
    %c0_16 = arith.constant 0 : index
    %21 = vector.load %arg7[%c0_15, %c0_16] : memref<1x128xf32, #tpu.memory_space<vmem>>, vector<1x128xf32>
    %22 = vector.broadcast %21 : vector<1x128xf32> to vector<8x128xf32>
    %23 = arith.addf %20, %22 : vector<8x128xf32>
    %24 = vector.extract_strided_slice %23 {offsets = [0, 0], sizes = [8, 4], strides = [1, 1]} : vector<8x128xf32> to vector<8x4xf32>
    %25 = vector.extract_strided_slice %23 {offsets = [0, 4], sizes = [8, 4], strides = [1, 1]} : vector<8x128xf32> to vector<8x4xf32>
    %26 = math.tanh %25 : vector<8x4xf32>
    %cst_17 = arith.constant 1.000000e+00 : f32
    %27 = vector.broadcast %cst_17 : f32 to vector<8x4xf32>
    %28 = arith.addf %26, %27 : vector<8x4xf32>
    %cst_18 = arith.constant 6.000000e+00 : f32
    %29 = vector.broadcast %cst_18 : f32 to vector<8x4xf32>
    %30 = arith.mulf %29, %28 : vector<8x4xf32>
    %cst_19 = arith.constant -1.000000e+01 : f32
    %31 = vector.broadcast %cst_19 : f32 to vector<8x4xf32>
    %32 = arith.addf %31, %30 : vector<8x4xf32>
    %33 = math.exp %32 : vector<8x4xf32>
    %34 = arith.mulf %2, %33 : vector<8x4xf32>
    %35 = arith.addf %24, %34 : vector<8x4xf32>
    %cst_20 = arith.constant -5.000000e-01 : f32
    %36 = vector.broadcast %cst_20 : f32 to vector<8x4xf32>
    %37 = arith.mulf %36, %2 : vector<8x4xf32>
    %38 = arith.mulf %37, %2 : vector<8x4xf32>
    %39 = arith.subf %38, %32 : vector<8x4xf32>
    %cst_21 = arith.constant dense<0.000000e+00> : vector<8xf32>
    %40 = vector.multi_reduction <add>, %39, %cst_21 [1] : vector<8x4xf32> to vector<8xf32>
    %41 = vector.shape_cast %40 : vector<8xf32> to vector<8x1xf32>
    %cst_22 = arith.constant 3.67575407 : f32
    %42 = vector.broadcast %cst_22 : f32 to vector<8x1xf32>
    %43 = arith.subf %41, %42 : vector<8x1xf32>
    %44 = math.tanh %24 : vector<8x4xf32>
    %45 = math.tanh %35 : vector<8x4xf32>
    %46 = arith.mulf %45, %45 : vector<8x4xf32>
    %cst_23 = arith.constant 1.000000e+00 : f32
    %47 = vector.broadcast %cst_23 : f32 to vector<8x4xf32>
    %48 = arith.subf %47, %46 : vector<8x4xf32>
    %cst_24 = arith.constant 0.000000e+00 : f32
    %49 = vector.broadcast %cst_24 : f32 to vector<8x4xf32>
    %50 = arith.maximumf %48, %49 : vector<8x4xf32>
    %cst_25 = arith.constant 9.99999997E-7 : f32
    %51 = vector.broadcast %cst_25 : f32 to vector<8x4xf32>
    %52 = arith.addf %50, %51 : vector<8x4xf32>
    %53 = math.log %52 : vector<8x4xf32>
    %cst_26 = arith.constant dense<0.000000e+00> : vector<8xf32>
    %54 = vector.multi_reduction <add>, %53, %cst_26 [1] : vector<8x4xf32> to vector<8xf32>
    %55 = vector.shape_cast %54 : vector<8xf32> to vector<8x1xf32>
    %56 = arith.subf %43, %55 : vector<8x1xf32>
    %cst_27 = arith.constant 0.000000e+00 : f32
    %57 = vector.broadcast %cst_27 : f32 to vector<8x115xf32>
    %58 = tpu.concatenate %44, %45, %32, %56, %57 in 1 : vector<8x4xf32>, vector<8x4xf32>, vector<8x4xf32>, vector<8x1xf32>, vector<8x115xf32> -> vector<8x128xf32>
    %c0_28 = arith.constant 0 : index
    %c0_29 = arith.constant 0 : index
    %59 = vector.load %arg8[%c0_28, %c0_29] : memref<8x128xf32, #tpu.memory_space<vmem>>, vector<8x128xf32>
    tpu.vector_store %arg8[%c0_28, %c0_29], %58 {strides = array<i32>} : memref<8x128xf32, #tpu.memory_space<vmem>>, vector<8x128xf32>,
    return
  }
  func.func @transform_0(%arg0: i32) -> (i32, i32) {
    %c0_i32 = arith.constant 0 : i32
    %c0_i32_0 = arith.constant 0 : i32
    return %arg0, %c0_i32 : i32, i32
  }
  func.func @transform_1(%arg0: i32) -> (i32, i32) {
    %c0_i32 = arith.constant 0 : i32
    %c0_i32_0 = arith.constant 0 : i32
    %c0_i32_1 = arith.constant 0 : i32
    return %c0_i32, %c0_i32_0 : i32, i32
  }
  func.func @transform_2(%arg0: i32) -> (i32, i32) {
    %c0_i32 = arith.constant 0 : i32
    %c0_i32_0 = arith.constant 0 : i32
    %c0_i32_1 = arith.constant 0 : i32
    return %c0_i32, %c0_i32_0 : i32, i32
  }
  func.func @transform_3(%arg0: i32) -> (i32, i32) {
    %c0_i32 = arith.constant 0 : i32
    %c0_i32_0 = arith.constant 0 : i32
    %c0_i32_1 = arith.constant 0 : i32
    return %c0_i32, %c0_i32_0 : i32, i32
  }
  func.func @transform_4(%arg0: i32) -> (i32, i32) {
    %c0_i32 = arith.constant 0 : i32
    %c0_i32_0 = arith.constant 0 : i32
    %c0_i32_1 = arith.constant 0 : i32
    return %c0_i32, %c0_i32_0 : i32, i32
  }
  func.func @transform_5(%arg0: i32) -> (i32, i32) {
    %c0_i32 = arith.constant 0 : i32
    %c0_i32_0 = arith.constant 0 : i32
    %c0_i32_1 = arith.constant 0 : i32
    return %c0_i32, %c0_i32_0 : i32, i32
  }
  func.func @transform_6(%arg0: i32) -> (i32, i32) {
    %c0_i32 = arith.constant 0 : i32
    %c0_i32_0 = arith.constant 0 : i32
    %c0_i32_1 = arith.constant 0 : i32
    return %c0_i32, %c0_i32_0 : i32, i32
  }
  func.func @transform_7(%arg0: i32) -> (i32, i32) {
    %c0_i32 = arith.constant 0 : i32
    %c0_i32_0 = arith.constant 0 : i32
    return %arg0, %c0_i32 : i32, i32
  }
}

</mosaic_0001>

<llo_original>
// kernel: tpu_custom_call.1
$region0: #{tpu_custom_call.1}
  #allocation0 [shape = 'u32[]', space=smem, size = 0x4, offset = 0x4, fixed_abs, tag = 'smem constant byte address 0x4 - core index']
  #allocation1 [shape = 'u32[144,128]{1,0:T(1,128)}', space=vmem, size = 0x12000, scoped, tag = 'internal scratch']
  %s0 = inlined_call_operand.hbm [shape: bf16[8,128], index: 0, kind: input, shape index: {}]
  %s1 = inlined_call_operand.hbm [shape: bf16[128,128], index: 1, kind: input, shape index: {}]
  %s2 = inlined_call_operand.vmem [shape: f32[1,128], index: 2, kind: input, shape index: {}]
  %s3 = inlined_call_operand.hbm [shape: bf16[128,128], index: 3, kind: input, shape index: {}]
  %s4 = inlined_call_operand.vmem [shape: f32[1,128], index: 4, kind: input, shape index: {}]
  %s5 = inlined_call_operand.hbm [shape: bf16[128,128], index: 5, kind: input, shape index: {}]
  %s6 = inlined_call_operand.vmem [shape: f32[1,128], index: 6, kind: input, shape index: {}]
  %s7 = inlined_call_operand.hbm [shape: f32[8,128], index: 7, kind: output, shape index: {}]
  %s8 = sld [smem:[#allocation0]]
  $region54: #{tpu_custom_call.1} parent=0
    _
  %s10 = ssub.s32 1, %s8
  %s11 = scalar_select 0, %s10, %s8
  $region1: #{tpu_custom_call.1} parent=0
    #allocation2 [shape = 'u8[2048]{0}', space=vmem, size = 0x800, scoped, tag = 'input window, operand 0, single buffered']
    #allocation3 [shape = 's32[1]{0}', space=sflag, size = 0x4, scoped, tag = 'scoped memory for tpu_custom_call.1']
    #allocation4 [shape = 's32[1]{0}', space=sflag, size = 0x4, scoped, tag = 'scoped memory for tpu_custom_call.1']
    #allocation5 [shape = 'u8[32768]{0}', space=vmem, size = 0x8000, scoped, tag = 'input window, operand 1, single buffered']
    #allocation6 [shape = 's32[1]{0}', space=sflag, size = 0x4, scoped, tag = 'scoped memory for tpu_custom_call.1']
    #allocation7 [shape = 'u8[32768]{0}', space=vmem, size = 0x8000, scoped, tag = 'input window, operand 3, single buffered']
    #allocation8 [shape = 'u8[32768]{0}', space=vmem, size = 0x8000, scoped, tag = 'input window, operand 5, single buffered']
    #allocation9 [shape = 's32[1]{0}', space=sflag, size = 0x4, scoped, tag = 'scoped memory for tpu_custom_call.1']
    #allocation10 [shape = 'u8[4096]{0}', space=vmem, size = 0x1000, scoped, tag = 'output window, operand 0, single buffered']
    %12 = vsyncpa [#allocation3], 0
    %13 = vsyncpa [#allocation6], 0
    %14 = vsyncpa [#allocation9], 0
    %15 = vsyncpa [#allocation4], 0
    // Predicated region
    $region2: #{tpu_custom_call.1} parent=1 // pred_check
      _
    $region3: #{tpu_custom_call.1} parent=1 // pred_check_branch
      %17 = sbr.rel (0) target = $region5
    $region4: #{tpu_custom_call.1} parent=1 // pred_region
      %s19 = ssub.s32 64, 64
      %20 = vsyncadd [#allocation3], %s19
      %s22 = sshll.u32 [#allocation2], 4
      %s23 = int_to_ptr.vmem [resolvable:$true] %s22
      %25 = dma.hbm_to_vmem [thread:$0]  %s0, 64, %s23, [#allocation3]
    $region5: #{tpu_custom_call.1} parent=1 // pred_fallthru
      _
    // Predicated region
    $region6: #{tpu_custom_call.1} parent=1 // pred_check
      _
    $region7: #{tpu_custom_call.1} parent=1 // pred_check_branch
      %27 = sbr.rel (0) target = $region9
    $region8: #{tpu_custom_call.1} parent=1 // pred_region
      %s29 = ssub.s32 1024, 1024
      %30 = vsyncadd [#allocation6], %s29
      %s31 = sshll.u32 [#allocation5], 4
      %s32 = int_to_ptr.vmem [resolvable:$true] %s31
      %37 = dma.hbm_to_vmem [thread:$0]  %s1, 1024, %s32, [#allocation6], 64, 64, 4
    $region9: #{tpu_custom_call.1} parent=1 // pred_fallthru
      _
    // Predicated region
    $region10: #{tpu_custom_call.1} parent=1 // pred_check
      _
    $region11: #{tpu_custom_call.1} parent=1 // pred_check_branch
      %39 = sbr.rel (0) target = $region13
    $region12: #{tpu_custom_call.1} parent=1 // pred_region
      _
    $region13: #{tpu_custom_call.1} parent=1 // pred_fallthru
      _
    // Predicated region
    $region14: #{tpu_custom_call.1} parent=1 // pred_check
      _
    $region15: #{tpu_custom_call.1} parent=1 // pred_check_branch
      %41 = sbr.rel (0) target = $region17
    $region16: #{tpu_custom_call.1} parent=1 // pred_region
      %s43 = ssub.s32 1024, 1024
      %44 = vsyncadd [#allocation6], %s43
      %s45 = sshll.u32 [#allocation7], 4
      %s46 = int_to_ptr.vmem [resolvable:$true] %s45
      %51 = dma.hbm_to_vmem [thread:$0]  %s3, 1024, %s46, [#allocation6], 64, 64, 4
    $region17: #{tpu_custom_call.1} parent=1 // pred_fallthru
      _
    // Predicated region
    $region18: #{tpu_custom_call.1} parent=1 // pred_check
      _
    $region19: #{tpu_custom_call.1} parent=1 // pred_check_branch
      %53 = sbr.rel (0) target = $region21
    $region20: #{tpu_custom_call.1} parent=1 // pred_region
      _
    $region21: #{tpu_custom_call.1} parent=1 // pred_fallthru
      _
    // Predicated region
    $region22: #{tpu_custom_call.1} parent=1 // pred_check
      _
    $region23: #{tpu_custom_call.1} parent=1 // pred_check_branch
      %55 = sbr.rel (0) target = $region25
    $region24: #{tpu_custom_call.1} parent=1 // pred_region
      %s57 = ssub.s32 1024, 1024
      %58 = vsyncadd [#allocation9], %s57
      %s59 = sshll.u32 [#allocation8], 4
      %s60 = int_to_ptr.vmem [resolvable:$true] %s59
      %65 = dma.hbm_to_vmem [thread:$0]  %s5, 1024, %s60, [#allocation9], 64, 64, 4
    $region25: #{tpu_custom_call.1} parent=1 // pred_fallthru
      _
    // Predicated region
    $region26: #{tpu_custom_call.1} parent=1 // pred_check
      _
    $region27: #{tpu_custom_call.1} parent=1 // pred_check_branch
      %67 = sbr.rel (0) target = $region29
    $region28: #{tpu_custom_call.1} parent=1 // pred_region
      _
    $region29: #{tpu_custom_call.1} parent=1 // pred_fallthru
      _
    // Predicated region
    $region30: #{tpu_custom_call.1} parent=1 // pred_check
      _
    $region31: #{tpu_custom_call.1} parent=1 // pred_check_branch
      %69 = sbr.rel (0) target = $region33
    $region32: #{tpu_custom_call.1} parent=1 // pred_region
      %70 = dma.done [#allocation3], 64
    $region33: #{tpu_custom_call.1} parent=1 // pred_fallthru
      _
    // Predicated region
    $region34: #{tpu_custom_call.1} parent=1 // pred_check
      _
    $region35: #{tpu_custom_call.1} parent=1 // pred_check_branch
      %72 = sbr.rel (0) target = $region37
    $region36: #{tpu_custom_call.1} parent=1 // pred_region
      %73 = dma.done [#allocation6], 1024
    $region37: #{tpu_custom_call.1} parent=1 // pred_fallthru
      _
    // Predicated region
    $region38: #{tpu_custom_call.1} parent=1 // pred_check
      _
    $region39: #{tpu_custom_call.1} parent=1 // pred_check_branch
      %75 = sbr.rel (0) target = $region41
    $region40: #{tpu_custom_call.1} parent=1 // pred_region
      %76 = dma.done [#allocation6], 1024
    $region41: #{tpu_custom_call.1} parent=1 // pred_fallthru
      _
    // Predicated region
    $region42: #{tpu_custom_call.1} parent=1 // pred_check
      _
    $region43: #{tpu_custom_call.1} parent=1 // pred_check_branch
      %78 = sbr.rel (0) target = $region45
    $region44: #{tpu_custom_call.1} parent=1 // pred_region
      %79 = dma.done [#allocation9], 1024
    $region45: #{tpu_custom_call.1} parent=1 // pred_fallthru
      _
    %v81 = vld [vmem:[#allocation2] sm:$0xf]
    %v82 = vunpack.c.l.bf16 %v81
    %v83 = vld [vmem:[#allocation5] sm:$0xf]
    %v84 = vld [vmem:[#allocation5 + $0x4] sm:$0xf]
    %v85 = vld [vmem:[#allocation5 + $0x8] sm:$0xf]
    %v86 = vld [vmem:[#allocation5 + $0xc] sm:$0xf]
    %v87 = vld [vmem:[#allocation5 + $0x10] sm:$0xf]
    %v88 = vld [vmem:[#allocation5 + $0x14] sm:$0xf]
    %v89 = vld [vmem:[#allocation5 + $0x18] sm:$0xf]
    %v90 = vld [vmem:[#allocation5 + $0x1c] sm:$0xf]
    %v91 = vld [vmem:[#allocation5 + $0x20] sm:$0xf]
    %v92 = vld [vmem:[#allocation5 + $0x24] sm:$0xf]
    %v93 = vld [vmem:[#allocation5 + $0x28] sm:$0xf]
    %v94 = vld [vmem:[#allocation5 + $0x2c] sm:$0xf]
    %v95 = vld [vmem:[#allocation5 + $0x30] sm:$0xf]
    %v96 = vld [vmem:[#allocation5 + $0x34] sm:$0xf]
    %v97 = vld [vmem:[#allocation5 + $0x38] sm:$0xf]
    %v98 = vld [vmem:[#allocation5 + $0x3c] sm:$0xf]
    %v99 = vld [vmem:[%s2] sm:$0x1]
    %v101 = vlaneseq
    %v102 = vshrl.u32 %v101, 7
    %v103 = vsub.s32 0, %v102
    %v104 = vrot.slane %v99, %v103
    %v122 = vunpack.c.l.b16 %v83
    %v123 = vunpack.c.l.b16 %v84
    %v124 = vunpack.c.l.b16 %v85
    %v125 = vunpack.c.l.b16 %v86
    %v126 = vunpack.c.l.b16 %v87
    %v127 = vunpack.c.l.b16 %v88
    %v128 = vunpack.c.l.b16 %v89
    %v129 = vunpack.c.l.b16 %v90
    %v130 = vunpack.c.l.b16 %v91
    %v131 = vunpack.c.l.b16 %v92
    %v132 = vunpack.c.l.b16 %v93
    %v133 = vunpack.c.l.b16 %v94
    %v134 = vunpack.c.l.b16 %v95
    %v135 = vunpack.c.l.b16 %v96
    %v136 = vunpack.c.l.b16 %v97
    %v137 = vunpack.c.l.b16 %v98
    %v138 = vpack.c.b16 %v123, %v122
    %v139 = vpack.c.b16 %v125, %v124
    %v140 = vpack.c.b16 %v127, %v126
    %v141 = vpack.c.b16 %v129, %v128
    %v142 = vpack.c.b16 %v131, %v130
    %v143 = vpack.c.b16 %v133, %v132
    %v144 = vpack.c.b16 %v135, %v134
    %v145 = vpack.c.b16 %v137, %v136
    %154 = vmatprep.subr.bf16.mxu0 0
    %155 = vmatpush1.bf16.msra.mxu0 %v138
    %156 = vmatprep.subr.bf16.mxu0 0
    %157 = vmatpush1.bf16.msra.mxu0 %v139
    %158 = vmatprep.subr.bf16.mxu0 0
    %159 = vmatpush1.bf16.msra.mxu0 %v140
    %160 = vmatprep.subr.bf16.mxu0 0
    %161 = vmatpush1.bf16.msra.mxu0 %v141
    %162 = vmatprep.subr.bf16.mxu0 0
    %163 = vmatpush1.bf16.msra.mxu0 %v142
    %164 = vmatprep.subr.bf16.mxu0 0
    %165 = vmatpush1.bf16.msra.mxu0 %v143
    %166 = vmatprep.subr.bf16.mxu0 0
    %167 = vmatpush1.bf16.msra.mxu0 %v144
    %168 = vmatprep.subr.bf16.mxu0 0
    %169 = vmatpush1.bf16.msra.mxu0 %v145
    %170 = vmatprep.subr.bf16.mxu0 0
    %171 = vmatpush1.bf16.msra.mxu0 0
    %172 = vmatprep.subr.bf16.mxu0 0
    %173 = vmatpush1.bf16.msra.mxu0 0
    %174 = vmatprep.subr.bf16.mxu0 0
    %175 = vmatpush1.bf16.msra.mxu0 0
    %176 = vmatprep.subr.bf16.mxu0 0
    %177 = vmatpush1.bf16.msra.mxu0 0
    %178 = vmatprep.subr.bf16.mxu0 0
    %179 = vmatpush1.bf16.msra.mxu0 0
    %180 = vmatprep.subr.bf16.mxu0 0
    %181 = vmatpush1.bf16.msra.mxu0 0
    %182 = vmatprep.subr.bf16.mxu0 0
    %183 = vmatpush1.bf16.msra.mxu0 0
    %184 = vmatprep.subr.bf16.mxu0 0
    %185 = vmatpush1.bf16.msra.mxu0 0
    %186 = vmatprep.mubr.bf16.mxu0 0
    %187 = vmatmul.mubr.bf16.gmra.mrb[0].mxu0 %v81
    %v188 = vpop.f32.mrb[0].mxu0
    %v189 = vadd.f32 %v104, %v188
    %v190 = vpop.f32.mrb[0].mxu0
    %v191 = vpop.f32.mrb[0].mxu0
    %v192 = vpop.f32.mrb[0].mxu0
    %193 = vdwg.mxu0
    %v194 = vmax.f32 %v189, 0.0
    %v195 = vpack.c.bf16 %v194, %v194
    %v196 = vld [vmem:[#allocation7] sm:$0xf]
    %v197 = vld [vmem:[#allocation7 + $0x4] sm:$0xf]
    %v198 = vld [vmem:[#allocation7 + $0x8] sm:$0xf]
    %v199 = vld [vmem:[#allocation7 + $0xc] sm:$0xf]
    %v200 = vld [vmem:[#allocation7 + $0x10] sm:$0xf]
    %v201 = vld [vmem:[#allocation7 + $0x14] sm:$0xf]
    %v202 = vld [vmem:[#allocation7 + $0x18] sm:$0xf]
    %v203 = vld [vmem:[#allocation7 + $0x1c] sm:$0xf]
    %v204 = vld [vmem:[#allocation7 + $0x20] sm:$0xf]
    %v205 = vld [vmem:[#allocation7 + $0x24] sm:$0xf]
    %v206 = vld [vmem:[#allocation7 + $0x28] sm:$0xf]
    %v207 = vld [vmem:[#allocation7 + $0x2c] sm:$0xf]
    %v208 = vld [vmem:[#allocation7 + $0x30] sm:$0xf]
    %v209 = vld [vmem:[#allocation7 + $0x34] sm:$0xf]
    %v210 = vld [vmem:[#allocation7 + $0x38] sm:$0xf]
    %v211 = vld [vmem:[#allocation7 + $0x3c] sm:$0xf]
    %v212 = vld [vmem:[%s4] sm:$0x1]
    %v214 = vlaneseq
    %v215 = vshrl.u32 %v214, 7
    %v216 = vsub.s32 0, %v215
    %v217 = vrot.slane %v212, %v216
    %v235 = vunpack.c.l.b16 %v196
    %v236 = vunpack.c.l.b16 %v197
    %v237 = vunpack.c.l.b16 %v198
    %v238 = vunpack.c.l.b16 %v199
    %v239 = vunpack.c.l.b16 %v200
    %v240 = vunpack.c.l.b16 %v201
    %v241 = vunpack.c.l.b16 %v202
    %v242 = vunpack.c.l.b16 %v203
    %v243 = vunpack.c.l.b16 %v204
    %v244 = vunpack.c.l.b16 %v205
    %v245 = vunpack.c.l.b16 %v206
    %v246 = vunpack.c.l.b16 %v207
    %v247 = vunpack.c.l.b16 %v208
    %v248 = vunpack.c.l.b16 %v209
    %v249 = vunpack.c.l.b16 %v210
    %v250 = vunpack.c.l.b16 %v211
    %v251 = vpack.c.b16 %v236, %v235
    %v252 = vpack.c.b16 %v238, %v237
    %v253 = vpack.c.b16 %v240, %v239
    %v254 = vpack.c.b16 %v242, %v241
    %v255 = vpack.c.b16 %v244, %v243
    %v256 = vpack.c.b16 %v246, %v245
    %v257 = vpack.c.b16 %v248, %v247
    %v258 = vpack.c.b16 %v250, %v249
    %267 = vmatprep.subr.bf16.mxu0 0
    %268 = vmatpush1.bf16.msra.mxu0 %v251
    %269 = vmatprep.subr.bf16.mxu0 0
    %270 = vmatpush1.bf16.msra.mxu0 %v252
    %271 = vmatprep.subr.bf16.mxu0 0
    %272 = vmatpush1.bf16.msra.mxu0 %v253
    %273 = vmatprep.subr.bf16.mxu0 0
    %274 = vmatpush1.bf16.msra.mxu0 %v254
    %275 = vmatprep.subr.bf16.mxu0 0
    %276 = vmatpush1.bf16.msra.mxu0 %v255
    %277 = vmatprep.subr.bf16.mxu0 0
    %278 = vmatpush1.bf16.msra.mxu0 %v256
    %279 = vmatprep.subr.bf16.mxu0 0
    %280 = vmatpush1.bf16.msra.mxu0 %v257
    %281 = vmatprep.subr.bf16.mxu0 0
    %282 = vmatpush1.bf16.msra.mxu0 %v258
    %283 = vmatprep.subr.bf16.mxu0 0
    %284 = vmatpush1.bf16.msra.mxu0 0
    %285 = vmatprep.subr.bf16.mxu0 0
    %286 = vmatpush1.bf16.msra.mxu0 0
    %287 = vmatprep.subr.bf16.mxu0 0
    %288 = vmatpush1.bf16.msra.mxu0 0
    %289 = vmatprep.subr.bf16.mxu0 0
    %290 = vmatpush1.bf16.msra.mxu0 0
    %291 = vmatprep.subr.bf16.mxu0 0
    %292 = vmatpush1.bf16.msra.mxu0 0
    %293 = vmatprep.subr.bf16.mxu0 0
    %294 = vmatpush1.bf16.msra.mxu0 0
    %295 = vmatprep.subr.bf16.mxu0 0
    %296 = vmatpush1.bf16.msra.mxu0 0
    %297 = vmatprep.subr.bf16.mxu0 0
    %298 = vmatpush1.bf16.msra.mxu0 0
    %299 = vmatprep.mubr.bf16.mxu0 0
    %300 = vmatmul.mubr.bf16.gmra.mrb[0].mxu0 %v195
    %v301 = vpop.f32.mrb[0].mxu0
    %v302 = vadd.f32 %v217, %v301
    %v303 = vpop.f32.mrb[0].mxu0
    %v304 = vpop.f32.mrb[0].mxu0
    %v305 = vpop.f32.mrb[0].mxu0
    %306 = vdwg.mxu0
    %v307 = vmax.f32 %v302, 0.0
    %v308 = vpack.c.bf16 %v307, %v307
    %v309 = vld [vmem:[#allocation8] sm:$0xf]
    %v310 = vld [vmem:[#allocation8 + $0x4] sm:$0xf]
    %v311 = vld [vmem:[#allocation8 + $0x8] sm:$0xf]
    %v312 = vld [vmem:[#allocation8 + $0xc] sm:$0xf]
    %v313 = vld [vmem:[#allocation8 + $0x10] sm:$0xf]
    %v314 = vld [vmem:[#allocation8 + $0x14] sm:$0xf]
    %v315 = vld [vmem:[#allocation8 + $0x18] sm:$0xf]
    %v316 = vld [vmem:[#allocation8 + $0x1c] sm:$0xf]
    %v317 = vld [vmem:[#allocation8 + $0x20] sm:$0xf]
    %v318 = vld [vmem:[#allocation8 + $0x24] sm:$0xf]
    %v319 = vld [vmem:[#allocation8 + $0x28] sm:$0xf]
    %v320 = vld [vmem:[#allocation8 + $0x2c] sm:$0xf]
    %v321 = vld [vmem:[#allocation8 + $0x30] sm:$0xf]
    %v322 = vld [vmem:[#allocation8 + $0x34] sm:$0xf]
    %v323 = vld [vmem:[#allocation8 + $0x38] sm:$0xf]
    %v324 = vld [vmem:[#allocation8 + $0x3c] sm:$0xf]
    %v325 = vld [vmem:[%s6] sm:$0x1]
    %v327 = vlaneseq
    %v328 = vshrl.u32 %v327, 7
    %v329 = vsub.s32 0, %v328
    %v330 = vrot.slane %v325, %v329
    %v348 = vunpack.c.l.b16 %v309
    %v349 = vunpack.c.l.b16 %v310
    %v350 = vunpack.c.l.b16 %v311
    %v351 = vunpack.c.l.b16 %v312
    %v352 = vunpack.c.l.b16 %v313
    %v353 = vunpack.c.l.b16 %v314
    %v354 = vunpack.c.l.b16 %v315
    %v355 = vunpack.c.l.b16 %v316
    %v356 = vunpack.c.l.b16 %v317
    %v357 = vunpack.c.l.b16 %v318
    %v358 = vunpack.c.l.b16 %v319
    %v359 = vunpack.c.l.b16 %v320
    %v360 = vunpack.c.l.b16 %v321
    %v361 = vunpack.c.l.b16 %v322
    %v362 = vunpack.c.l.b16 %v323
    %v363 = vunpack.c.l.b16 %v324
    %v364 = vpack.c.b16 %v349, %v348
    %v365 = vpack.c.b16 %v351, %v350
    %v366 = vpack.c.b16 %v353, %v352
    %v367 = vpack.c.b16 %v355, %v354
    %v368 = vpack.c.b16 %v357, %v356
    %v369 = vpack.c.b16 %v359, %v358
    %v370 = vpack.c.b16 %v361, %v360
    %v371 = vpack.c.b16 %v363, %v362
    %380 = vmatprep.subr.bf16.mxu0 0
    %381 = vmatpush1.bf16.msra.mxu0 %v364
    %382 = vmatprep.subr.bf16.mxu0 0
    %383 = vmatpush1.bf16.msra.mxu0 %v365
    %384 = vmatprep.subr.bf16.mxu0 0
    %385 = vmatpush1.bf16.msra.mxu0 %v366
    %386 = vmatprep.subr.bf16.mxu0 0
    %387 = vmatpush1.bf16.msra.mxu0 %v367
    %388 = vmatprep.subr.bf16.mxu0 0
    %389 = vmatpush1.bf16.msra.mxu0 %v368
    %390 = vmatprep.subr.bf16.mxu0 0
    %391 = vmatpush1.bf16.msra.mxu0 %v369
    %392 = vmatprep.subr.bf16.mxu0 0
    %393 = vmatpush1.bf16.msra.mxu0 %v370
    %394 = vmatprep.subr.bf16.mxu0 0
    %395 = vmatpush1.bf16.msra.mxu0 %v371
    %396 = vmatprep.subr.bf16.mxu0 0
    %397 = vmatpush1.bf16.msra.mxu0 0
    %398 = vmatprep.subr.bf16.mxu0 0
    %399 = vmatpush1.bf16.msra.mxu0 0
    %400 = vmatprep.subr.bf16.mxu0 0
    %401 = vmatpush1.bf16.msra.mxu0 0
    %402 = vmatprep.subr.bf16.mxu0 0
    %403 = vmatpush1.bf16.msra.mxu0 0
    %404 = vmatprep.subr.bf16.mxu0 0
    %405 = vmatpush1.bf16.msra.mxu0 0
    %406 = vmatprep.subr.bf16.mxu0 0
    %407 = vmatpush1.bf16.msra.mxu0 0
    %408 = vmatprep.subr.bf16.mxu0 0
    %409 = vmatpush1.bf16.msra.mxu0 0
    %410 = vmatprep.subr.bf16.mxu0 0
    %411 = vmatpush1.bf16.msra.mxu0 0
    %412 = vmatprep.mubr.bf16.mxu0 0
    %413 = vmatmul.mubr.bf16.gmra.mrb[0].mxu0 %v308
    %v414 = vpop.f32.mrb[0].mxu0
    %v415 = vadd.f32 %v330, %v414
    %v416 = vpop.f32.mrb[0].mxu0
    %v417 = vpop.f32.mrb[0].mxu0
    %v418 = vpop.f32.mrb[0].mxu0
    %419 = vdwg.mxu0
    %v420 = vtanh.pop %v415
    %v421 = vadd.f32 %v420, 1.0
    %v422 = vmul.f32 %v421, 6.0
    %v423 = vadd.f32 %v422, -10.0
    %v424 = vmul.f32 %v423, 1.442695
    %v425 = vpow.pop %v424
    %427 = vrot.lane.b32.xlu0 %v425, 28
    %v428 = vpop.permute.xlu0 %427
    %v430 = vmul.f32 %v82, %v428
    %432 = vrot.lane.b32.xlu0 %v430, 96
    %v433 = vpop.permute.xlu0 %432
    %v435 = vadd.f32 %v415, %v433
    %v436 = vmul.f32 %v82, -0.5
    %v437 = vmul.f32 %v436, %v82
    %439 = vrot.lane.b32.xlu0 %v423, 28
    %v440 = vpop.permute.xlu0 %439
    %v442 = vsub.f32 %v437, %v440
    %444 = vrot.lane.b32.xlu0 %v442, 96
    %v445 = vpop.permute.xlu0 %444
    %vm447 = vcmask 31744
    %v448 = vsel %vm447, %v445, 0.0
    %449 = vadd.xlane.f32.xlu0 %v448
    %v450 = vpop.xlane.xlu0 %449
    %v451 = vsub.f32 %v450, 3.675754
    %v452 = vtanh.pop %v435
    %v453 = vmul.f32 %v452, %v452
    %v454 = vsub.f32 1.0, %v453
    %v455 = vmax.f32 %v454, 0.0
    %v456 = vadd.f32 %v455, 1e-06
    %v457 = vlog2.pop %v456
    %v458 = vmul.f32 %v457, 0.6931472
    %v459 = vsel %vm447, %v458, 0.0
    %460 = vadd.xlane.f32.xlu0 %v459
    %v461 = vpop.xlane.xlu0 %460
    %v462 = vsub.f32 %v451, %v461
    %464 = vrot.lane.b32.xlu0 %v452, 4
    %v465 = vpop.permute.xlu0 %464
    %467 = vrot.lane.b32.xlu0 %v423, 4
    %v468 = vpop.permute.xlu0 %467
    %v470 = vsel %vm447, %v420, %v465
    %vm471 = vcmask 64512
    %v472 = vsel %vm471, %v470, %v468
    %vm473 = vcmask 97280
    %v474 = vsel %vm473, %v472, %v462
    %vm475 = vcmask 105472
    %v476 = vsel %vm475, %v474, 0.0
    %477 = vst [vmem:[#allocation10] sm:$0xff] %v476
    // Predicated region
    $region46: #{tpu_custom_call.1} parent=1 // pred_check
      _
    $region47: #{tpu_custom_call.1} parent=1 // pred_check_branch
      %479 = sbr.rel (0) target = $region49
    $region48: #{tpu_custom_call.1} parent=1 // pred_region
      %s481 = ssub.s32 128, 128
      %482 = vsyncadd [#allocation4], %s481
      %s484 = sshll.u32 [#allocation10], 4
      %s485 = int_to_ptr.vmem [resolvable:$true] %s484
      %487 = dma.vmem_to_hbm [thread:$0]  %s485, 128, %s7, [#allocation4]
    $region49: #{tpu_custom_call.1} parent=1 // pred_fallthru
      _
    // Predicated region
    $region50: #{tpu_custom_call.1} parent=1 // pred_check
      _
    $region51: #{tpu_custom_call.1} parent=1 // pred_check_branch
      %489 = sbr.rel (0) target = $region53
    $region52: #{tpu_custom_call.1} parent=1 // pred_region
      %490 = dma.done [#allocation4], 128
    $region53: #{tpu_custom_call.1} parent=1 // pred_fallthru
      _
    %491 = vsyncpa [#allocation3], 1
    %492 = vsyncpa [#allocation6], 1
    %493 = vsyncpa [#allocation9], 1
    %494 = vsyncpa [#allocation4], 1

// kernel: tpu_custom_call.1
$region0: #{tpu_custom_call.1}
  #allocation0 [shape = 'u32[]', space=smem, size = 0x4, offset = 0x4, fixed_abs, tag = 'smem constant byte address 0x4 - core index']
  #allocation1 [shape = 'u32[144,128]{1,0:T(1,128)}', space=vmem, size = 0x12000, scoped, tag = 'internal scratch']
  %s0 = inlined_call_operand.hbm [shape: bf16[8,128], index: 0, kind: input, shape index: {}]
  %s1 = inlined_call_operand.hbm [shape: bf16[128,128], index: 1, kind: input, shape index: {}]
  %s2 = inlined_call_operand.vmem [shape: f32[1,128], index: 2, kind: input, shape index: {}]
  %s3 = inlined_call_operand.hbm [shape: bf16[128,128], index: 3, kind: input, shape index: {}]
  %s4 = inlined_call_operand.vmem [shape: f32[1,128], index: 4, kind: input, shape index: {}]
  %s5 = inlined_call_operand.hbm [shape: bf16[128,128], index: 5, kind: input, shape index: {}]
  %s6 = inlined_call_operand.vmem [shape: f32[1,128], index: 6, kind: input, shape index: {}]
  %s7 = inlined_call_operand.hbm [shape: f32[8,128], index: 7, kind: output, shape index: {}]
  %s8 = sld [smem:[#allocation0]]
  $region54: #{tpu_custom_call.1} parent=0
    _
  %s10 = ssub.s32 1, %s8
  %s11 = scalar_select 0, %s10, %s8
  $region1: #{tpu_custom_call.1} parent=0
    #allocation2 [shape = 'u8[2048]{0}', space=vmem, size = 0x800, scoped, tag = 'input window, operand 0, single buffered']
    #allocation3 [shape = 's32[1]{0}', space=sflag, size = 0x4, scoped, tag = 'scoped memory for tpu_custom_call.1']
    #allocation4 [shape = 's32[1]{0}', space=sflag, size = 0x4, scoped, tag = 'scoped memory for tpu_custom_call.1']
    #allocation5 [shape = 'u8[32768]{0}', space=vmem, size = 0x8000, scoped, tag = 'input window, operand 1, single buffered']
    #allocation6 [shape = 's32[1]{0}', space=sflag, size = 0x4, scoped, tag = 'scoped memory for tpu_custom_call.1']
    #allocation7 [shape = 'u8[32768]{0}', space=vmem, size = 0x8000, scoped, tag = 'input window, operand 3, single buffered']
    #allocation8 [shape = 'u8[32768]{0}', space=vmem, size = 0x8000, scoped, tag = 'input window, operand 5, single buffered']
    #allocation9 [shape = 's32[1]{0}', space=sflag, size = 0x4, scoped, tag = 'scoped memory for tpu_custom_call.1']
    #allocation10 [shape = 'u8[4096]{0}', space=vmem, size = 0x1000, scoped, tag = 'output window, operand 0, single buffered']
    %12 = vsyncpa [#allocation3], 0
    %13 = vsyncpa [#allocation6], 0
    %14 = vsyncpa [#allocation9], 0
    %15 = vsyncpa [#allocation4], 0
    // Predicated region
    $region2: #{tpu_custom_call.1} parent=1 // pred_check
      _
    $region3: #{tpu_custom_call.1} parent=1 // pred_check_branch
      %17 = sbr.rel (0) target = $region5
    $region4: #{tpu_custom_call.1} parent=1 // pred_region
      %s19 = ssub.s32 64, 64
      %20 = vsyncadd [#allocation3], %s19
      %s22 = sshll.u32 [#allocation2], 4
      %s23 = int_to_ptr.vmem [resolvable:$true] %s22
      %25 = dma.hbm_to_vmem [thread:$0]  %s0, 64, %s23, [#allocation3]
    $region5: #{tpu_custom_call.1} parent=1 // pred_fallthru
      _
    // Predicated region
    $region6: #{tpu_custom_call.1} parent=1 // pred_check
      _
    $region7: #{tpu_custom_call.1} parent=1 // pred_check_branch
      %27 = sbr.rel (0) target = $region9
    $region8: #{tpu_custom_call.1} parent=1 // pred_region
      %s29 = ssub.s32 1024, 1024
      %30 = vsyncadd [#allocation6], %s29
      %s31 = sshll.u32 [#allocation5], 4
      %s32 = int_to_ptr.vmem [resolvable:$true] %s31
      %37 = dma.hbm_to_vmem [thread:$0]  %s1, 1024, %s32, [#allocation6], 64, 64, 4
    $region9: #{tpu_custom_call.1} parent=1 // pred_fallthru
      _
    // Predicated region
    $region10: #{tpu_custom_call.1} parent=1 // pred_check
      _
    $region11: #{tpu_custom_call.1} parent=1 // pred_check_branch
      %39 = sbr.rel (0) target = $region13
    $region12: #{tpu_custom_call.1} parent=1 // pred_region
      _
    $region13: #{tpu_custom_call.1} parent=1 // pred_fallthru
      _
    // Predicated region
    $region14: #{tpu_custom_call.1} parent=1 // pred_check
      _
    $region15: #{tpu_custom_call.1} parent=1 // pred_check_branch
      %41 = sbr.rel (0) target = $region17
    $region16: #{tpu_custom_call.1} parent=1 // pred_region
      %s43 = ssub.s32 1024, 1024
      %44 = vsyncadd [#allocation6], %s43
      %s45 = sshll.u32 [#allocation7], 4
      %s46 = int_to_ptr.vmem [resolvable:$true] %s45
      %51 = dma.hbm_to_vmem [thread:$0]  %s3, 1024, %s46, [#allocation6], 64, 64, 4
    $region17: #{tpu_custom_call.1} parent=1 // pred_fallthru
      _
    // Predicated region
    $region18: #{tpu_custom_call.1} parent=1 // pred_check
      _
    $region19: #{tpu_custom_call.1} parent=1 // pred_check_branch
      %53 = sbr.rel (0) target = $region21
    $region20: #{tpu_custom_call.1} parent=1 // pred_region
      _
    $region21: #{tpu_custom_call.1} parent=1 // pred_fallthru
      _
    // Predicated region
    $region22: #{tpu_custom_call.1} parent=1 // pred_check
      _
    $region23: #{tpu_custom_call.1} parent=1 // pred_check_branch
      %55 = sbr.rel (0) target = $region25
    $region24: #{tpu_custom_call.1} parent=1 // pred_region
      %s57 = ssub.s32 1024, 1024
      %58 = vsyncadd [#allocation9], %s57
      %s59 = sshll.u32 [#allocation8], 4
      %s60 = int_to_ptr.vmem [resolvable:$true] %s59
      %65 = dma.hbm_to_vmem [thread:$0]  %s5, 1024, %s60, [#allocation9], 64, 64, 4
    $region25: #{tpu_custom_call.1} parent=1 // pred_fallthru
      _
    // Predicated region
    $region26: #{tpu_custom_call.1} parent=1 // pred_check
      _
    $region27: #{tpu_custom_call.1} parent=1 // pred_check_branch
      %67 = sbr.rel (0) target = $region29
    $region28: #{tpu_custom_call.1} parent=1 // pred_region
      _
    $region29: #{tpu_custom_call.1} parent=1 // pred_fallthru
      _
    // Predicated region
    $region30: #{tpu_custom_call.1} parent=1 // pred_check
      _
    $region31: #{tpu_custom_call.1} parent=1 // pred_check_branch
      %69 = sbr.rel (0) target = $region33
    $region32: #{tpu_custom_call.1} parent=1 // pred_region
      %70 = dma.done [#allocation3], 64
    $region33: #{tpu_custom_call.1} parent=1 // pred_fallthru
      _
    // Predicated region
    $region34: #{tpu_custom_call.1} parent=1 // pred_check
      _
    $region35: #{tpu_custom_call.1} parent=1 // pred_check_branch
      %72 = sbr.rel (0) target = $region37
    $region36: #{tpu_custom_call.1} parent=1 // pred_region
      %73 = dma.done [#allocation6], 1024
    $region37: #{tpu_custom_call.1} parent=1 // pred_fallthru
      _
    // Predicated region
    $region38: #{tpu_custom_call.1} parent=1 // pred_check
      _
    $region39: #{tpu_custom_call.1} parent=1 // pred_check_branch
      %75 = sbr.rel (0) target = $region41
    $region40: #{tpu_custom_call.1} parent=1 // pred_region
      %76 = dma.done [#allocation6], 1024
    $region41: #{tpu_custom_call.1} parent=1 // pred_fallthru
      _
    // Predicated region
    $region42: #{tpu_custom_call.1} parent=1 // pred_check
      _
    $region43: #{tpu_custom_call.1} parent=1 // pred_check_branch
      %78 = sbr.rel (0) target = $region45
    $region44: #{tpu_custom_call.1} parent=1 // pred_region
      %79 = dma.done [#allocation9], 1024
    $region45: #{tpu_custom_call.1} parent=1 // pred_fallthru
      _
    %v81 = vld [vmem:[#allocation2] sm:$0xf]
    %v82 = vunpack.c.l.bf16 %v81
    %v83 = vld [vmem:[#allocation5] sm:$0xf]
    %v84 = vld [vmem:[#allocation5 + $0x4] sm:$0xf]
    %v85 = vld [vmem:[#allocation5 + $0x8] sm:$0xf]
    %v86 = vld [vmem:[#allocation5 + $0xc] sm:$0xf]
    %v87 = vld [vmem:[#allocation5 + $0x10] sm:$0xf]
    %v88 = vld [vmem:[#allocation5 + $0x14] sm:$0xf]
    %v89 = vld [vmem:[#allocation5 + $0x18] sm:$0xf]
    %v90 = vld [vmem:[#allocation5 + $0x1c] sm:$0xf]
    %v91 = vld [vmem:[#allocation5 + $0x20] sm:$0xf]
    %v92 = vld [vmem:[#allocation5 + $0x24] sm:$0xf]
    %v93 = vld [vmem:[#allocation5 + $0x28] sm:$0xf]
    %v94 = vld [vmem:[#allocation5 + $0x2c] sm:$0xf]
    %v95 = vld [vmem:[#allocation5 + $0x30] sm:$0xf]
    %v96 = vld [vmem:[#allocation5 + $0x34] sm:$0xf]
    %v97 = vld [vmem:[#allocation5 + $0x38] sm:$0xf]
    %v98 = vld [vmem:[#allocation5 + $0x3c] sm:$0xf]
    %v99 = vld [vmem:[%s2] sm:$0x1]
    %v101 = vlaneseq
    %v102 = vshrl.u32 %v101, 7
    %v103 = vsub.s32 0, %v102
    %v104 = vrot.slane %v99, %v103
    %v122 = vunpack.c.l.b16 %v83
    %v123 = vunpack.c.l.b16 %v84
    %v124 = vunpack.c.l.b16 %v85
    %v125 = vunpack.c.l.b16 %v86
    %v126 = vunpack.c.l.b16 %v87
    %v127 = vunpack.c.l.b16 %v88
    %v128 = vunpack.c.l.b16 %v89
    %v129 = vunpack.c.l.b16 %v90
    %v130 = vunpack.c.l.b16 %v91
    %v131 = vunpack.c.l.b16 %v92
    %v132 = vunpack.c.l.b16 %v93
    %v133 = vunpack.c.l.b16 %v94
    %v134 = vunpack.c.l.b16 %v95
    %v135 = vunpack.c.l.b16 %v96
    %v136 = vunpack.c.l.b16 %v97
    %v137 = vunpack.c.l.b16 %v98
    %v138 = vpack.c.b16 %v123, %v122
    %v139 = vpack.c.b16 %v125, %v124
    %v140 = vpack.c.b16 %v127, %v126
    %v141 = vpack.c.b16 %v129, %v128
    %v142 = vpack.c.b16 %v131, %v130
    %v143 = vpack.c.b16 %v133, %v132
    %v144 = vpack.c.b16 %v135, %v134
    %v145 = vpack.c.b16 %v137, %v136
    %154 = vmatprep.subr.bf16.mxu0 0
    %155 = vmatpush1.bf16.msra.mxu0 %v138
    %156 = vmatprep.subr.bf16.mxu0 0
    %157 = vmatpush1.bf16.msra.mxu0 %v139
    %158 = vmatprep.subr.bf16.mxu0 0
    %159 = vmatpush1.bf16.msra.mxu0 %v140
    %160 = vmatprep.subr.bf16.mxu0 0
    %161 = vmatpush1.bf16.msra.mxu0 %v141
    %162 = vmatprep.subr.bf16.mxu0 0
    %163 = vmatpush1.bf16.msra.mxu0 %v142
    %164 = vmatprep.subr.bf16.mxu0 0
    %165 = vmatpush1.bf16.msra.mxu0 %v143
    %166 = vmatprep.subr.bf16.mxu0 0
    %167 = vmatpush1.bf16.msra.mxu0 %v144
    %168 = vmatprep.subr.bf16.mxu0 0
    %169 = vmatpush1.bf16.msra.mxu0 %v145
    %170 = vmatprep.subr.bf16.mxu0 0
    %171 = vmatpush1.bf16.msra.mxu0 0
    %172 = vmatprep.subr.bf16.mxu0 0
    %173 = vmatpush1.bf16.msra.mxu0 0
    %174 = vmatprep.subr.bf16.mxu0 0
    %175 = vmatpush1.bf16.msra.mxu0 0
    %176 = vmatprep.subr.bf16.mxu0 0
    %177 = vmatpush1.bf16.msra.mxu0 0
    %178 = vmatprep.subr.bf16.mxu0 0
    %179 = vmatpush1.bf16.msra.mxu0 0
    %180 = vmatprep.subr.bf16.mxu0 0
    %181 = vmatpush1.bf16.msra.mxu0 0
    %182 = vmatprep.subr.bf16.mxu0 0
    %183 = vmatpush1.bf16.msra.mxu0 0
    %184 = vmatprep.subr.bf16.mxu0 0
    %185 = vmatpush1.bf16.msra.mxu0 0
    %186 = vmatprep.mubr.bf16.mxu0 0
    %187 = vmatmul.mubr.bf16.gmra.mrb[0].mxu0 %v81
    %v188 = vpop.f32.mrb[0].mxu0
    %v189 = vadd.f32 %v104, %v188
    %v190 = vpop.f32.mrb[0].mxu0
    %v191 = vpop.f32.mrb[0].mxu0
    %v192 = vpop.f32.mrb[0].mxu0
    %193 = vdwg.mxu0
    %v194 = vmax.f32 %v189, 0.0
    %v195 = vpack.c.bf16 %v194, %v194
    %v196 = vld [vmem:[#allocation7] sm:$0xf]
    %v197 = vld [vmem:[#allocation7 + $0x4] sm:$0xf]
    %v198 = vld [vmem:[#allocation7 + $0x8] sm:$0xf]
    %v199 = vld [vmem:[#allocation7 + $0xc] sm:$0xf]
    %v200 = vld [vmem:[#allocation7 + $0x10] sm:$0xf]
    %v201 = vld [vmem:[#allocation7 + $0x14] sm:$0xf]
    %v202 = vld [vmem:[#allocation7 + $0x18] sm:$0xf]
    %v203 = vld [vmem:[#allocation7 + $0x1c] sm:$0xf]
    %v204 = vld [vmem:[#allocation7 + $0x20] sm:$0xf]
    %v205 = vld [vmem:[#allocation7 + $0x24] sm:$0xf]
    %v206 = vld [vmem:[#allocation7 + $0x28] sm:$0xf]
    %v207 = vld [vmem:[#allocation7 + $0x2c] sm:$0xf]
    %v208 = vld [vmem:[#allocation7 + $0x30] sm:$0xf]
    %v209 = vld [vmem:[#allocation7 + $0x34] sm:$0xf]
    %v210 = vld [vmem:[#allocation7 + $0x38] sm:$0xf]
    %v211 = vld [vmem:[#allocation7 + $0x3c] sm:$0xf]
    %v212 = vld [vmem:[%s4] sm:$0x1]
    %v214 = vlaneseq
    %v215 = vshrl.u32 %v214, 7
    %v216 = vsub.s32 0, %v215
    %v217 = vrot.slane %v212, %v216
    %v235 = vunpack.c.l.b16 %v196
    %v236 = vunpack.c.l.b16 %v197
    %v237 = vunpack.c.l.b16 %v198
    %v238 = vunpack.c.l.b16 %v199
    %v239 = vunpack.c.l.b16 %v200
    %v240 = vunpack.c.l.b16 %v201
    %v241 = vunpack.c.l.b16 %v202
    %v242 = vunpack.c.l.b16 %v203
    %v243 = vunpack.c.l.b16 %v204
    %v244 = vunpack.c.l.b16 %v205
    %v245 = vunpack.c.l.b16 %v206
    %v246 = vunpack.c.l.b16 %v207
    %v247 = vunpack.c.l.b16 %v208
    %v248 = vunpack.c.l.b16 %v209
    %v249 = vunpack.c.l.b16 %v210
    %v250 = vunpack.c.l.b16 %v211
    %v251 = vpack.c.b16 %v236, %v235
    %v252 = vpack.c.b16 %v238, %v237
    %v253 = vpack.c.b16 %v240, %v239
    %v254 = vpack.c.b16 %v242, %v241
    %v255 = vpack.c.b16 %v244, %v243
    %v256 = vpack.c.b16 %v246, %v245
    %v257 = vpack.c.b16 %v248, %v247
    %v258 = vpack.c.b16 %v250, %v249
    %267 = vmatprep.subr.bf16.mxu0 0
    %268 = vmatpush1.bf16.msra.mxu0 %v251
    %269 = vmatprep.subr.bf16.mxu0 0
    %270 = vmatpush1.bf16.msra.mxu0 %v252
    %271 = vmatprep.subr.bf16.mxu0 0
    %272 = vmatpush1.bf16.msra.mxu0 %v253
    %273 = vmatprep.subr.bf16.mxu0 0
    %274 = vmatpush1.bf16.msra.mxu0 %v254
    %275 = vmatprep.subr.bf16.mxu0 0
    %276 = vmatpush1.bf16.msra.mxu0 %v255
    %277 = vmatprep.subr.bf16.mxu0 0
    %278 = vmatpush1.bf16.msra.mxu0 %v256
    %279 = vmatprep.subr.bf16.mxu0 0
    %280 = vmatpush1.bf16.msra.mxu0 %v257
    %281 = vmatprep.subr.bf16.mxu0 0
    %282 = vmatpush1.bf16.msra.mxu0 %v258
    %283 = vmatprep.subr.bf16.mxu0 0
    %284 = vmatpush1.bf16.msra.mxu0 0
    %285 = vmatprep.subr.bf16.mxu0 0
    %286 = vmatpush1.bf16.msra.mxu0 0
    %287 = vmatprep.subr.bf16.mxu0 0
    %288 = vmatpush1.bf16.msra.mxu0 0
    %289 = vmatprep.subr.bf16.mxu0 0
    %290 = vmatpush1.bf16.msra.mxu0 0
    %291 = vmatprep.subr.bf16.mxu0 0
    %292 = vmatpush1.bf16.msra.mxu0 0
    %293 = vmatprep.subr.bf16.mxu0 0
    %294 = vmatpush1.bf16.msra.mxu0 0
    %295 = vmatprep.subr.bf16.mxu0 0
    %296 = vmatpush1.bf16.msra.mxu0 0
    %297 = vmatprep.subr.bf16.mxu0 0
    %298 = vmatpush1.bf16.msra.mxu0 0
    %299 = vmatprep.mubr.bf16.mxu0 0
    %300 = vmatmul.mubr.bf16.gmra.mrb[0].mxu0 %v195
    %v301 = vpop.f32.mrb[0].mxu0
    %v302 = vadd.f32 %v217, %v301
    %v303 = vpop.f32.mrb[0].mxu0
    %v304 = vpop.f32.mrb[0].mxu0
    %v305 = vpop.f32.mrb[0].mxu0
    %306 = vdwg.mxu0
    %v307 = vmax.f32 %v302, 0.0
    %v308 = vpack.c.bf16 %v307, %v307
    %v309 = vld [vmem:[#allocation8] sm:$0xf]
    %v310 = vld [vmem:[#allocation8 + $0x4] sm:$0xf]
    %v311 = vld [vmem:[#allocation8 + $0x8] sm:$0xf]
    %v312 = vld [vmem:[#allocation8 + $0xc] sm:$0xf]
    %v313 = vld [vmem:[#allocation8 + $0x10] sm:$0xf]
    %v314 = vld [vmem:[#allocation8 + $0x14] sm:$0xf]
    %v315 = vld [vmem:[#allocation8 + $0x18] sm:$0xf]
    %v316 = vld [vmem:[#allocation8 + $0x1c] sm:$0xf]
    %v317 = vld [vmem:[#allocation8 + $0x20] sm:$0xf]
    %v318 = vld [vmem:[#allocation8 + $0x24] sm:$0xf]
    %v319 = vld [vmem:[#allocation8 + $0x28] sm:$0xf]
    %v320 = vld [vmem:[#allocation8 + $0x2c] sm:$0xf]
    %v321 = vld [vmem:[#allocation8 + $0x30] sm:$0xf]
    %v322 = vld [vmem:[#allocation8 + $0x34] sm:$0xf]
    %v323 = vld [vmem:[#allocation8 + $0x38] sm:$0xf]
    %v324 = vld [vmem:[#allocation8 + $0x3c] sm:$0xf]
    %v325 = vld [vmem:[%s6] sm:$0x1]
    %v327 = vlaneseq
    %v328 = vshrl.u32 %v327, 7
    %v329 = vsub.s32 0, %v328
    %v330 = vrot.slane %v325, %v329
    %v348 = vunpack.c.l.b16 %v309
    %v349 = vunpack.c.l.b16 %v310
    %v350 = vunpack.c.l.b16 %v311
    %v351 = vunpack.c.l.b16 %v312
    %v352 = vunpack.c.l.b16 %v313
    %v353 = vunpack.c.l.b16 %v314
    %v354 = vunpack.c.l.b16 %v315
    %v355 = vunpack.c.l.b16 %v316
    %v356 = vunpack.c.l.b16 %v317
    %v357 = vunpack.c.l.b16 %v318
    %v358 = vunpack.c.l.b16 %v319
    %v359 = vunpack.c.l.b16 %v320
    %v360 = vunpack.c.l.b16 %v321
    %v361 = vunpack.c.l.b16 %v322
    %v362 = vunpack.c.l.b16 %v323
    %v363 = vunpack.c.l.b16 %v324
    %v364 = vpack.c.b16 %v349, %v348
    %v365 = vpack.c.b16 %v351, %v350
    %v366 = vpack.c.b16 %v353, %v352
    %v367 = vpack.c.b16 %v355, %v354
    %v368 = vpack.c.b16 %v357, %v356
    %v369 = vpack.c.b16 %v359, %v358
    %v370 = vpack.c.b16 %v361, %v360
    %v371 = vpack.c.b16 %v363, %v362
    %380 = vmatprep.subr.bf16.mxu0 0
    %381 = vmatpush1.bf16.msra.mxu0 %v364
    %382 = vmatprep.subr.bf16.mxu0 0
    %383 = vmatpush1.bf16.msra.mxu0 %v365
    %384 = vmatprep.subr.bf16.mxu0 0
    %385 = vmatpush1.bf16.msra.mxu0 %v366
    %386 = vmatprep.subr.bf16.mxu0 0
    %387 = vmatpush1.bf16.msra.mxu0 %v367
    %388 = vmatprep.subr.bf16.mxu0 0
    %389 = vmatpush1.bf16.msra.mxu0 %v368
    %390 = vmatprep.subr.bf16.mxu0 0
    %391 = vmatpush1.bf16.msra.mxu0 %v369
    %392 = vmatprep.subr.bf16.mxu0 0
    %393 = vmatpush1.bf16.msra.mxu0 %v370
    %394 = vmatprep.subr.bf16.mxu0 0
    %395 = vmatpush1.bf16.msra.mxu0 %v371
    %396 = vmatprep.subr.bf16.mxu0 0
    %397 = vmatpush1.bf16.msra.mxu0 0
    %398 = vmatprep.subr.bf16.mxu0 0
    %399 = vmatpush1.bf16.msra.mxu0 0
    %400 = vmatprep.subr.bf16.mxu0 0
    %401 = vmatpush1.bf16.msra.mxu0 0
    %402 = vmatprep.subr.bf16.mxu0 0
    %403 = vmatpush1.bf16.msra.mxu0 0
    %404 = vmatprep.subr.bf16.mxu0 0
    %405 = vmatpush1.bf16.msra.mxu0 0
    %406 = vmatprep.subr.bf16.mxu0 0
    %407 = vmatpush1.bf16.msra.mxu0 0
    %408 = vmatprep.subr.bf16.mxu0 0
    %409 = vmatpush1.bf16.msra.mxu0 0
    %410 = vmatprep.subr.bf16.mxu0 0
    %411 = vmatpush1.bf16.msra.mxu0 0
    %412 = vmatprep.mubr.bf16.mxu0 0
    %413 = vmatmul.mubr.bf16.gmra.mrb[0].mxu0 %v308
    %v414 = vpop.f32.mrb[0].mxu0
    %v415 = vadd.f32 %v330, %v414
    %v416 = vpop.f32.mrb[0].mxu0
    %v417 = vpop.f32.mrb[0].mxu0
    %v418 = vpop.f32.mrb[0].mxu0
    %419 = vdwg.mxu0
    %v420 = vtanh.pop %v415
    %v421 = vadd.f32 %v420, 1.0
    %v422 = vmul.f32 %v421, 6.0
    %v423 = vadd.f32 %v422, -10.0
    %v424 = vmul.f32 %v423, 1.442695
    %v425 = vpow.pop %v424
    %427 = vrot.lane.b32.xlu0 %v425, 28
    %v428 = vpop.permute.xlu0 %427
    %v430 = vmul.f32 %v82, %v428
    %432 = vrot.lane.b32.xlu0 %v430, 96
    %v433 = vpop.permute.xlu0 %432
    %v435 = vadd.f32 %v415, %v433
    %v436 = vmul.f32 %v82, -0.5
    %v437 = vmul.f32 %v436, %v82
    %439 = vrot.lane.b32.xlu0 %v423, 28
    %v440 = vpop.permute.xlu0 %439
    %v442 = vsub.f32 %v437, %v440
    %444 = vrot.lane.b32.xlu0 %v442, 96
    %v445 = vpop.permute.xlu0 %444
    %vm447 = vcmask 31744
    %v448 = vsel %vm447, %v445, 0.0
    %449 = vadd.xlane.f32.xlu0 %v448
    %v450 = vpop.xlane.xlu0 %449
    %v451 = vsub.f32 %v450, 3.675754
    %v452 = vtanh.pop %v435
    %v453 = vmul.f32 %v452, %v452
    %v454 = vsub.f32 1.0, %v453
    %v455 = vmax.f32 %v454, 0.0
    %v456 = vadd.f32 %v455, 1e-06
    %v457 = vlog2.pop %v456
    %v458 = vmul.f32 %v457, 0.6931472
    %v459 = vsel %vm447, %v458, 0.0
    %460 = vadd.xlane.f32.xlu0 %v459
    %v461 = vpop.xlane.xlu0 %460
    %v462 = vsub.f32 %v451, %v461
    %464 = vrot.lane.b32.xlu0 %v452, 4
    %v465 = vpop.permute.xlu0 %464
    %467 = vrot.lane.b32.xlu0 %v423, 4
    %v468 = vpop.permute.xlu0 %467
    %v470 = vsel %vm447, %v420, %v465
    %vm471 = vcmask 64512
    %v472 = vsel %vm471, %v470, %v468
    %vm473 = vcmask 97280
    %v474 = vsel %vm473, %v472, %v462
    %vm475 = vcmask 105472
    %v476 = vsel %vm475, %v474, 0.0
    %477 = vst [vmem:[#allocation10] sm:$0xff] %v476
    // Predicated region
    $region46: #{tpu_custom_call.1} parent=1 // pred_check
      _
    $region47: #{tpu_custom_call.1} parent=1 // pred_check_branch
      %479 = sbr.rel (0) target = $region49
    $region48: #{tpu_custom_call.1} parent=1 // pred_region
      %s481 = ssub.s32 128, 128
      %482 = vsyncadd [#allocation4], %s481
      %s484 = sshll.u32 [#allocation10], 4
      %s485 = int_to_ptr.vmem [resolvable:$true] %s484
      %487 = dma.vmem_to_hbm [thread:$0]  %s485, 128, %s7, [#allocation4]
    $region49: #{tpu_custom_call.1} parent=1 // pred_fallthru
      _
    // Predicated region
    $region50: #{tpu_custom_call.1} parent=1 // pred_check
      _
    $region51: #{tpu_custom_call.1} parent=1 // pred_check_branch
      %489 = sbr.rel (0) target = $region53
    $region52: #{tpu_custom_call.1} parent=1 // pred_region
      %490 = dma.done [#allocation4], 128
    $region53: #{tpu_custom_call.1} parent=1 // pred_fallthru
      _
    %491 = vsyncpa [#allocation3], 1
    %492 = vsyncpa [#allocation6], 1
    %493 = vsyncpa [#allocation9], 1
    %494 = vsyncpa [#allocation4], 1

</llo_original>
